<compile_context>
chip_gen: v6e
topology: v6e:2x2x1
jax: 0.10.0
libtpu: 0.0.40
codegen_flags: <defaults>
</compile_context>

<pallas_src>
import functools

import jax
import jax.numpy as jnp
from jax import lax
from jax.experimental import pallas as pl
from jax.experimental.pallas import tpu as pltpu

KSIZE = 3    # kernel_size
STRIDE = 2   # spatial_factor
BN_EPS = 1e-5


# ---------------- fused Pallas kernel ----------------

def _downsample_kernel(x_ref, halo_ref, scale_ref, shift_ref, w0_ref, w1_ref,
                       b_ref, o_ref, abuf_ref, *, tho, wo, cin, cout):
    """Eval-BN + ReLU + implicit (1,0)x(1,0) zero-pad + 3x3 stride-2 conv, one row tile.

    Packed-parity channel layout of x_ref / halo_ref (last dim, 4*cin wide):
        [q0=(ph=0,pw=0) | q1=(0,1) | q2=(1,0) | q3=(1,1)] * cin
    where plane (ph, pw) holds input pixel x[2*ho + ph, 2*wo + pw].

    Scratch abuf channel layout (6*cin wide):
        [q0 | q1 | q1<<1 | q2 | q3 | q3<<1]
    ("<<1" = shifted one output column right, i.e. reads column wo-1; column 0 is the
    left zero pad).  Scratch row t holds the activation of packed row (r*tho + t - 1);
    row 0 is the halo (zero at the top of each image).
    """
    r = pl.program_id(1)
    scale = scale_ref[...]
    shift = shift_ref[...]

    def bn_relu(v):                                  # (rows, wo, 4cin) -> f32
        return jnp.maximum(v.astype(jnp.float32) * scale + shift, 0.0)

    def shift_cols(v):                               # out[:, w] = v[:, w-1]; col 0 = 0
        zero_col = jnp.zeros_like(v[:, :1, :])
        return jnp.concatenate([zero_col, v[:, :-1, :]], axis=1)

    def stage(row0, nrows, act_f32):                 # write one bf16 staging block
        rows = pl.ds(row0, nrows)
        a16 = act_f32.astype(jnp.bfloat16)
        abuf_ref[rows, :, 0:2 * cin] = a16[..., 0:2 * cin]               # q0 | q1
        abuf_ref[rows, :, 3 * cin:5 * cin] = a16[..., 2 * cin:4 * cin]   # q2 | q3
        abuf_ref[rows, :, 2 * cin:3 * cin] = (
            shift_cols(act_f32[..., cin:2 * cin]).astype(jnp.bfloat16))  # q1 shifted
        abuf_ref[rows, :, 5 * cin:6 * cin] = (
            shift_cols(act_f32[..., 3 * cin:4 * cin]).astype(jnp.bfloat16))  # q3 shifted

    # Current row tile -> scratch rows [1 : tho + 1].
    stage(1, tho, bn_relu(x_ref[0]))
    # Halo row (previous input-row pair, fetched from HBM); zero at the image top.
    halo = bn_relu(halo_ref[0]) * (r > 0).astype(jnp.float32)
    stage(0, 1, halo)

    # Two deep, consecutive MXU matmuls cover all nine 3x3 taps.
    lhs0 = abuf_ref[1:tho + 1, :, :].reshape(tho * wo, 6 * cin)          # kh = 1, 2
    lhs1 = abuf_ref[0:tho, :, 3 * cin:6 * cin].reshape(tho * wo, 3 * cin)  # kh = 0
    acc = jnp.dot(lhs0, w0_ref[...], preferred_element_type=jnp.float32)
    acc = acc + jnp.dot(lhs1, w1_ref[...], preferred_element_type=jnp.float32)
    out = acc + b_ref[...]
    o_ref[0] = out.reshape(tho, wo, cout).astype(o_ref.dtype)


# ---------------- generation-aware tiling ----------------

def _vmem_capacity_bytes():
    try:
        info = pltpu.get_tpu_info()
        for name in ("vmem_capacity_bytes", "vmem_bytes", "vmem_size_bytes"):
            val = getattr(info, name, None)
            if val:
                return int(val)
    except Exception:
        pass
    return 64 * 1024 * 1024   # v7x per-TensorCore VMEM (most conservative)


def _tile_vmem_bytes(tho, wo, cin, cout, in_itemsize, out_itemsize):
    m = tho * wo
    c4, c6 = 4 * cin, 6 * cin
    total = 2 * (m + wo) * c4 * in_itemsize                       # in + halo, 2x buffered
    total += 2 * m * cout * out_itemsize                          # out, 2x buffered
    total += 2 * (9 * cin * cout * 2 + 2 * c4 * 4 + cout * 4)     # resident weights/params
    total += (tho + 1) * wo * c6 * 2                              # bf16 staging scratch
    total += m * (c4 * 4 + c4 * 2 + 2 * cin * 2 + 2 * cout * 4)   # in-kernel temporaries
    return total


def _pick_row_tile(ho, wo, cin, cout, in_itemsize, out_itemsize, budget):
    """Largest divisor of HO whose working set fits the per-generation VMEM budget."""
    best = 1
    for t in range(1, ho + 1):
        if ho % t == 0 and _tile_vmem_bytes(
                t, wo, cin, cout, in_itemsize, out_itemsize) <= budget:
            best = t
    return best


# ---------------- wrapper ----------------

def downsample_forward(x_nchw, params, *, row_tile=None, out_dtype=None):
    """Pallas forward of Downsample (eval-mode BN): Conv2d(pad(ReLU(BN(x))), 3, s=2)."""
    gamma, beta, running_mean, running_var, w_hwio, bias = params
    N, Cin, H, W = x_nchw.shape
    Cout = w_hwio.shape[-1]
    assert H >= STRIDE and W >= STRIDE
    HO, WO = H // STRIDE, W // STRIDE
    out_dtype = out_dtype or x_nchw.dtype

    # Folded eval-mode BatchNorm, tiled over the 4 parity planes.
    scale = (gamma / jnp.sqrt(running_var + BN_EPS)).astype(jnp.float32)
    shift = (beta - running_mean * scale).astype(jnp.float32)
    scale4 = jnp.tile(scale, STRIDE * STRIDE).reshape(1, 4 * Cin)
    shift4 = jnp.tile(shift, STRIDE * STRIDE).reshape(1, 4 * Cin)

    # Single layout pre-pass: NCHW -> packed-parity channels-last (N, HO, WO, 4*Cin),
    # original dtype kept in HBM.  Odd H/W: the last row/col never reaches any output
    # (PyTorch floor semantics with pad=(1,0)), so it is simply dropped.
    x_e = x_nchw[:, :, :STRIDE * HO, :STRIDE * WO]
    x_packed = (x_e.reshape(N, Cin, HO, STRIDE, WO, STRIDE)
                .transpose(0, 2, 4, 3, 5, 1)
                .reshape(N, HO, WO, 4 * Cin))

    # Tap weights grouped by input-row shift; channel order matches the scratch
    # layout documented in the kernel.  K0 = 6*Cin (six taps), K1 = 3*Cin (kh=0 taps).
    w = w_hwio.astype(jnp.float32)
    w0 = jnp.concatenate([w[1, 1], w[1, 2], w[1, 0],
                          w[2, 1], w[2, 2], w[2, 0]], axis=0).astype(jnp.bfloat16)
    w1 = jnp.concatenate([w[0, 1], w[0, 2], w[0, 0]], axis=0).astype(jnp.bfloat16)
    b2 = bias.reshape(1, Cout).astype(jnp.float32)

    cap = _vmem_capacity_bytes()
    budget = min(int(cap * 0.55), 72 * 1024 * 1024)
    if row_tile is None:
        tho = _pick_row_tile(HO, WO, Cin, Cout, x_packed.dtype.itemsize,
                             jnp.dtype(out_dtype).itemsize, budget)
    else:
        tho = row_tile
    assert HO % tho == 0, (HO, tho)
    grid = (N, HO // tho)

    kernel = functools.partial(_downsample_kernel, tho=tho, wo=WO, cin=Cin, cout=Cout)

    out = pl.pallas_call(
        kernel,
        out_shape=jax.ShapeDtypeStruct((N, HO, WO, Cout), out_dtype),
        grid=grid,
        in_specs=[
            # current row tile of the packed activation
            pl.BlockSpec((1, tho, WO, 4 * Cin), lambda n, r: (n, r, 0, 0)),
            # one-row halo (previous input-row pair) -> keeps both grid axes parallel
            pl.BlockSpec((1, 1, WO, 4 * Cin),
                         lambda n, r: (n, jnp.maximum(r * tho - 1, 0), 0, 0)),
            pl.BlockSpec((1, 4 * Cin), lambda n, r: (0, 0)),     # BN scale (resident)
            pl.BlockSpec((1, 4 * Cin), lambda n, r: (0, 0)),     # BN shift (resident)
            pl.BlockSpec((6 * Cin, Cout), lambda n, r: (0, 0)),  # W0       (resident)
            pl.BlockSpec((3 * Cin, Cout), lambda n, r: (0, 0)),  # W1       (resident)
            pl.BlockSpec((1, Cout), lambda n, r: (0, 0)),        # bias     (resident)
        ],
        out_specs=pl.BlockSpec((1, tho, WO, Cout), lambda n, r: (n, r, 0, 0)),
        scratch_shapes=[pltpu.VMEM((tho + 1, WO, 6 * Cin), jnp.bfloat16)],
        compiler_params=pltpu.CompilerParams(
            dimension_semantics=("parallel", "parallel"),
            vmem_limit_bytes=max(min(int(cap * 0.9), 112 * 1024 * 1024),
                                 32 * 1024 * 1024)),
    )(x_packed, x_packed, scale4, shift4, w0, w1, b2)

    # Back to NCHW for PyTorch-interface parity (single XLA layout pass).
    out = jnp.transpose(out, (0, 3, 1, 2))

    # Downsample.check_spatial semantics.
    assert out.shape[2] == H // STRIDE and out.shape[3] == W // STRIDE
    return out


# ---------------- pure-JAX reference (verification only) ----------------

def reference_forward(x_nchw, params):
    gamma, beta, mean, var, w_hwio, bias = params
    x = jnp.transpose(x_nchw, (0, 2, 3, 1)).astype(jnp.float32)
    h = jnp.maximum((x - mean) / jnp.sqrt(var + BN_EPS) * gamma + beta, 0.0)
    out = lax.conv_general_dilated(
        h, w_hwio.astype(jnp.float32), window_strides=(STRIDE, STRIDE),
        padding=((1, 0), (1, 0)),
        dimension_numbers=('NHWC', 'HWIO', 'NHWC'),
        precision=lax.Precision.HIGHEST)
    out = out + bias
    return jnp.transpose(out, (0, 3, 1, 2))


if __name__ == "__main__":
    key = jax.random.PRNGKey(0)
    k_x, k_w, k_b, k_g, k_be, k_m, k_v, k_x2 = jax.random.split(key, 8)

    N, Cin, H, W, Cout = 2, 4, 16, 16, 8
    x = jax.random.normal(k_x, (N, Cin, H, W), jnp.float32)
    # Conv2d(Cin, Cout, k=3, s=2) weight in HWIO (== torch (O,I,KH,KW).permute(2,3,1,0))
    w_hwio = 0.1 * jax.random.normal(k_w, (KSIZE, KSIZE, Cin, Cout), jnp.float32)
    bias = 0.1 * jax.random.normal(k_b, (Cout,), jnp.float32)
    # BatchNorm2d(Cin) parameters / running statistics (eval mode)
    gamma = 1.0 + 0.1 * jax.random.normal(k_g, (Cin,), jnp.float32)
    beta = 0.1 * jax.random.normal(k_be, (Cin,), jnp.float32)
    running_mean = 0.1 * jax.random.normal(k_m, (Cin,), jnp.float32)
    running_var = jax.random.uniform(k_v, (Cin,), jnp.float32, minval=0.5, maxval=1.5)
    params = (gamma, beta, running_mean, running_var, w_hwio, bias)

    ref = jax.block_until_ready(reference_forward(x, params))

    # Multi-row-tile path (grid (N, 4)): exercises the HBM halo fetch + top zero pad.
    out = jax.block_until_ready(downsample_forward(x, params, row_tile=2))
    assert out.shape == (N, Cout, H // 2, W // 2), out.shape
    assert jnp.allclose(out, ref, rtol=2e-2, atol=2e-2), \
        float(jnp.max(jnp.abs(out - ref)))

    # Auto (generation-aware) tile selection.
    out2 = jax.block_until_ready(downsample_forward(x, params))
    assert jnp.allclose(out2, ref, rtol=2e-2, atol=2e-2), \
        float(jnp.max(jnp.abs(out2 - ref)))

    # Odd spatial sizes (PyTorch floor semantics) -- previously unsupported.
    x_odd = jax.random.normal(k_x2, (1, Cin, 15, 13), jnp.float32)
    ref_odd = jax.block_until_ready(reference_forward(x_odd, params))
    out_odd = jax.block_until_ready(downsample_forward(x_odd, params))
    assert out_odd.shape == (1, Cout, 7, 6), out_odd.shape
    assert jnp.allclose(out_odd, ref_odd, rtol=2e-2, atol=2e-2), \
        float(jnp.max(jnp.abs(out_odd - ref_odd)))

    print("KERNEL_OK")
</pallas_src>

<mosaic_0001>
module attributes {stable_mosaic.version = 11 : i64} {
  func.func @_downsample_kernel(%arg0: i32, %arg1: i32, %arg2: memref<1x2x8x16xf32, #tpu.memory_space<vmem>>, %arg3: memref<1x1x8x16xf32, #tpu.memory_space<vmem>>, %arg4: memref<1x16xf32, #tpu.memory_space<vmem>>, %arg5: memref<1x16xf32, #tpu.memory_space<vmem>>, %arg6: memref<24x8xbf16, #tpu.memory_space<vmem>>, %arg7: memref<12x8xbf16, #tpu.memory_space<vmem>>, %arg8: memref<1x8xf32, #tpu.memory_space<vmem>>, %arg9: memref<1x2x8x8xf32, #tpu.memory_space<vmem>>, %arg10: memref<3x8x24xbf16, #tpu.memory_space<vmem>>) attributes {dimension_semantics = [#tpu.dimension_semantics<parallel>, #tpu.dimension_semantics<parallel>], iteration_bounds = array<i64: 2, 4>, scalar_prefetch = 0 : i64, scratch_operands = 1 : i64, tpu.core_type = #tpu.core_type<tc>, window_params = [{transform_indices = @transform_0, window_bounds = array<i64: 1, 2, 8, 16>}, {transform_indices = @transform_1, window_bounds = array<i64: 1, 1, 8, 16>}, {pipeline_mode = #tpu.pipeline_mode<synchronous>, transform_indices = @transform_2, window_bounds = array<i64: 1, 16>}, {pipeline_mode = #tpu.pipeline_mode<synchronous>, transform_indices = @transform_3, window_bounds = array<i64: 1, 16>}, {pipeline_mode = #tpu.pipeline_mode<synchronous>, transform_indices = @transform_4, window_bounds = array<i64: 24, 8>}, {pipeline_mode = #tpu.pipeline_mode<synchronous>, transform_indices = @transform_5, window_bounds = array<i64: 12, 8>}, {pipeline_mode = #tpu.pipeline_mode<synchronous>, transform_indices = @transform_6, window_bounds = array<i64: 1, 8>}, {transform_indices = @transform_7, window_bounds = array<i64: 1, 2, 8, 8>}]} {
    %c0 = arith.constant 0 : index
    %c0_0 = arith.constant 0 : index
    %0 = vector.load %arg4[%c0, %c0_0] : memref<1x16xf32, #tpu.memory_space<vmem>>, vector<1x16xf32>
    %c0_1 = arith.constant 0 : index
    %c0_2 = arith.constant 0 : index
    %1 = vector.load %arg5[%c0_1, %c0_2] : memref<1x16xf32, #tpu.memory_space<vmem>>, vector<1x16xf32>
    %c0_3 = arith.constant 0 : index
    %c0_4 = arith.constant 0 : index
    %c0_5 = arith.constant 0 : index
    %c0_6 = arith.constant 0 : index
    %2 = vector.load %arg2[%c0_3, %c0_4, %c0_5, %c0_6] : memref<1x2x8x16xf32, #tpu.memory_space<vmem>>, vector<1x2x8x16xf32>
    %3 = vector.shape_cast %2 : vector<1x2x8x16xf32> to vector<2x8x16xf32>
    %4 = vector.shape_cast %0 : vector<1x16xf32> to vector<1x1x16xf32>
    %5 = vector.broadcast %4 : vector<1x1x16xf32> to vector<2x8x16xf32>
    %6 = arith.mulf %3, %5 : vector<2x8x16xf32>
    %7 = vector.shape_cast %1 : vector<1x16xf32> to vector<1x1x16xf32>
    %8 = vector.broadcast %7 : vector<1x1x16xf32> to vector<2x8x16xf32>
    %9 = arith.addf %6, %8 : vector<2x8x16xf32>
    %cst = arith.constant 0.000000e+00 : f32
    %10 = vector.broadcast %cst : f32 to vector<2x8x16xf32>
    %11 = arith.maximumf %9, %10 : vector<2x8x16xf32>
    %12 = arith.truncf %11 : vector<2x8x16xf32> to vector<2x8x16xbf16>
    %13 = vector.extract_strided_slice %12 {offsets = [0, 0, 0], sizes = [2, 8, 8], strides = [1, 1, 1]} : vector<2x8x16xbf16> to vector<2x8x8xbf16>
    %c1 = arith.constant 1 : index
    %c0_7 = arith.constant 0 : index
    %c0_8 = arith.constant 0 : index
    %14 = vector.load %arg10[%c1, %c0_7, %c0_8] : memref<3x8x24xbf16, #tpu.memory_space<vmem>>, vector<2x8x8xbf16>
    tpu.vector_store %arg10[%c1, %c0_7, %c0_8], %13 {strides = array<i32>} : memref<3x8x24xbf16, #tpu.memory_space<vmem>>, vector<2x8x8xbf16>,
    %15 = vector.extract_strided_slice %12 {offsets = [0, 0, 8], sizes = [2, 8, 8], strides = [1, 1, 1]} : vector<2x8x16xbf16> to vector<2x8x8xbf16>
    %c1_9 = arith.constant 1 : index
    %c0_10 = arith.constant 0 : index
    %c12 = arith.constant 12 : index
    %16 = vector.load %arg10[%c1_9, %c0_10, %c12] : memref<3x8x24xbf16, #tpu.memory_space<vmem>>, vector<2x8x8xbf16>
    tpu.vector_store %arg10[%c1_9, %c0_10, %c12], %15 {strides = array<i32>} : memref<3x8x24xbf16, #tpu.memory_space<vmem>>, vector<2x8x8xbf16>,
    %17 = vector.extract_strided_slice %11 {offsets = [0, 0, 4], sizes = [2, 8, 4], strides = [1, 1, 1]} : vector<2x8x16xf32> to vector<2x8x4xf32>
    %cst_11 = arith.constant 0.000000e+00 : f32
    %18 = vector.broadcast %cst_11 : f32 to vector<2x1x4xf32>
    %19 = vector.extract_strided_slice %17 {offsets = [0, 0, 0], sizes = [2, 7, 4], strides = [1, 1, 1]} : vector<2x8x4xf32> to vector<2x7x4xf32>
    %20 = tpu.concatenate %18, %19 in 1 : vector<2x1x4xf32>, vector<2x7x4xf32> -> vector<2x8x4xf32>
    %21 = arith.truncf %20 : vector<2x8x4xf32> to vector<2x8x4xbf16>
    %c1_12 = arith.constant 1 : index
    %c0_13 = arith.constant 0 : index
    %c8 = arith.constant 8 : index
    %22 = vector.load %arg10[%c1_12, %c0_13, %c8] : memref<3x8x24xbf16, #tpu.memory_space<vmem>>, vector<2x8x4xbf16>
    tpu.vector_store %arg10[%c1_12, %c0_13, %c8], %21 {strides = array<i32>} : memref<3x8x24xbf16, #tpu.memory_space<vmem>>, vector<2x8x4xbf16>,
    %23 = vector.extract_strided_slice %11 {offsets = [0, 0, 12], sizes = [2, 8, 4], strides = [1, 1, 1]} : vector<2x8x16xf32> to vector<2x8x4xf32>
    %cst_14 = arith.constant 0.000000e+00 : f32
    %24 = vector.broadcast %cst_14 : f32 to vector<2x1x4xf32>
    %25 = vector.extract_strided_slice %23 {offsets = [0, 0, 0], sizes = [2, 7, 4], strides = [1, 1, 1]} : vector<2x8x4xf32> to vector<2x7x4xf32>
    %26 = tpu.concatenate %24, %25 in 1 : vector<2x1x4xf32>, vector<2x7x4xf32> -> vector<2x8x4xf32>
    %27 = arith.truncf %26 : vector<2x8x4xf32> to vector<2x8x4xbf16>
    %c1_15 = arith.constant 1 : index
    %c0_16 = arith.constant 0 : index
    %c20 = arith.constant 20 : index
    %28 = vector.load %arg10[%c1_15, %c0_16, %c20] : memref<3x8x24xbf16, #tpu.memory_space<vmem>>, vector<2x8x4xbf16>
    tpu.vector_store %arg10[%c1_15, %c0_16, %c20], %27 {strides = array<i32>} : memref<3x8x24xbf16, #tpu.memory_space<vmem>>, vector<2x8x4xbf16>,
    %c0_17 = arith.constant 0 : index
    %c0_18 = arith.constant 0 : index
    %c0_19 = arith.constant 0 : index
    %c0_20 = arith.constant 0 : index
    %29 = vector.load %arg3[%c0_17, %c0_18, %c0_19, %c0_20] : memref<1x1x8x16xf32, #tpu.memory_space<vmem>>, vector<1x1x8x16xf32>
    %30 = vector.shape_cast %29 : vector<1x1x8x16xf32> to vector<1x8x16xf32>
    %31 = vector.shape_cast %0 : vector<1x16xf32> to vector<1x1x16xf32>
    %32 = vector.broadcast %31 : vector<1x1x16xf32> to vector<1x8x16xf32>
    %33 = arith.mulf %30, %32 : vector<1x8x16xf32>
    %34 = vector.shape_cast %1 : vector<1x16xf32> to vector<1x1x16xf32>
    %35 = vector.broadcast %34 : vector<1x1x16xf32> to vector<1x8x16xf32>
    %36 = arith.addf %33, %35 : vector<1x8x16xf32>
    %cst_21 = arith.constant 0.000000e+00 : f32
    %37 = vector.broadcast %cst_21 : f32 to vector<1x8x16xf32>
    %38 = arith.maximumf %36, %37 : vector<1x8x16xf32>
    %c0_i32 = arith.constant 0 : i32
    %39 = arith.cmpi sgt, %arg1, %c0_i32 : i32
    %40 = arith.extui %39 : i1 to i32
    %41 = arith.sitofp %40 : i32 to f32
    %42 = vector.broadcast %41 : f32 to vector<1x8x16xf32>
    %43 = arith.mulf %38, %42 : vector<1x8x16xf32>
    %44 = arith.truncf %43 : vector<1x8x16xf32> to vector<1x8x16xbf16>
    %45 = vector.extract_strided_slice %44 {offsets = [0, 0, 0], sizes = [1, 8, 8], strides = [1, 1, 1]} : vector<1x8x16xbf16> to vector<1x8x8xbf16>
    %c0_22 = arith.constant 0 : index
    %c0_23 = arith.constant 0 : index
    %c0_24 = arith.constant 0 : index
    %46 = vector.load %arg10[%c0_22, %c0_23, %c0_24] : memref<3x8x24xbf16, #tpu.memory_space<vmem>>, vector<1x8x8xbf16>
    tpu.vector_store %arg10[%c0_22, %c0_23, %c0_24], %45 {strides = array<i32>} : memref<3x8x24xbf16, #tpu.memory_space<vmem>>, vector<1x8x8xbf16>,
    %47 = vector.extract_strided_slice %44 {offsets = [0, 0, 8], sizes = [1, 8, 8], strides = [1, 1, 1]} : vector<1x8x16xbf16> to vector<1x8x8xbf16>
    %c0_25 = arith.constant 0 : index
    %c0_26 = arith.constant 0 : index
    %c12_27 = arith.constant 12 : index
    %48 = vector.load %arg10[%c0_25, %c0_26, %c12_27] : memref<3x8x24xbf16, #tpu.memory_space<vmem>>, vector<1x8x8xbf16>
    tpu.vector_store %arg10[%c0_25, %c0_26, %c12_27], %47 {strides = array<i32>} : memref<3x8x24xbf16, #tpu.memory_space<vmem>>, vector<1x8x8xbf16>,
    %49 = vector.extract_strided_slice %43 {offsets = [0, 0, 4], sizes = [1, 8, 4], strides = [1, 1, 1]} : vector<1x8x16xf32> to vector<1x8x4xf32>
    %cst_28 = arith.constant 0.000000e+00 : f32
    %50 = vector.broadcast %cst_28 : f32 to vector<1x1x4xf32>
    %51 = vector.extract_strided_slice %49 {offsets = [0, 0, 0], sizes = [1, 7, 4], strides = [1, 1, 1]} : vector<1x8x4xf32> to vector<1x7x4xf32>
    %52 = tpu.concatenate %50, %51 in 1 : vector<1x1x4xf32>, vector<1x7x4xf32> -> vector<1x8x4xf32>
    %53 = arith.truncf %52 : vector<1x8x4xf32> to vector<1x8x4xbf16>
    %c0_29 = arith.constant 0 : index
    %c0_30 = arith.constant 0 : index
    %c8_31 = arith.constant 8 : index
    %54 = vector.load %arg10[%c0_29, %c0_30, %c8_31] : memref<3x8x24xbf16, #tpu.memory_space<vmem>>, vector<1x8x4xbf16>
    tpu.vector_store %arg10[%c0_29, %c0_30, %c8_31], %53 {strides = array<i32>} : memref<3x8x24xbf16, #tpu.memory_space<vmem>>, vector<1x8x4xbf16>,
    %55 = vector.extract_strided_slice %43 {offsets = [0, 0, 12], sizes = [1, 8, 4], strides = [1, 1, 1]} : vector<1x8x16xf32> to vector<1x8x4xf32>
    %cst_32 = arith.constant 0.000000e+00 : f32
    %56 = vector.broadcast %cst_32 : f32 to vector<1x1x4xf32>
    %57 = vector.extract_strided_slice %55 {offsets = [0, 0, 0], sizes = [1, 7, 4], strides = [1, 1, 1]} : vector<1x8x4xf32> to vector<1x7x4xf32>
    %58 = tpu.concatenate %56, %57 in 1 : vector<1x1x4xf32>, vector<1x7x4xf32> -> vector<1x8x4xf32>
    %59 = arith.truncf %58 : vector<1x8x4xf32> to vector<1x8x4xbf16>
    %c0_33 = arith.constant 0 : index
    %c0_34 = arith.constant 0 : index
    %c20_35 = arith.constant 20 : index
    %60 = vector.load %arg10[%c0_33, %c0_34, %c20_35] : memref<3x8x24xbf16, #tpu.memory_space<vmem>>, vector<1x8x4xbf16>
    tpu.vector_store %arg10[%c0_33, %c0_34, %c20_35], %59 {strides = array<i32>} : memref<3x8x24xbf16, #tpu.memory_space<vmem>>, vector<1x8x4xbf16>,
    %c1_36 = arith.constant 1 : index
    %c0_37 = arith.constant 0 : index
    %c0_38 = arith.constant 0 : index
    %61 = vector.load %arg10[%c1_36, %c0_37, %c0_38] : memref<3x8x24xbf16, #tpu.memory_space<vmem>>, vector<2x8x24xbf16>
    %62 = vector.shape_cast %61 : vector<2x8x24xbf16> to vector<16x24xbf16>
    %c0_39 = arith.constant 0 : index
    %c0_40 = arith.constant 0 : index
    %c12_41 = arith.constant 12 : index
    %63 = vector.load %arg10[%c0_39, %c0_40, %c12_41] : memref<3x8x24xbf16, #tpu.memory_space<vmem>>, vector<2x8x12xbf16>
    %64 = vector.shape_cast %63 : vector<2x8x12xbf16> to vector<16x12xbf16>
    %c0_42 = arith.constant 0 : index
    %c0_43 = arith.constant 0 : index
    %65 = vector.load %arg6[%c0_42, %c0_43] : memref<24x8xbf16, #tpu.memory_space<vmem>>, vector<24x8xbf16>
    %cst_44 = arith.constant dense<0.000000e+00> : vector<16x8xf32>
    %66 = tpu.matmul %62, %65, %cst_44 {dimension_numbers = #tpu.dot_dimension_numbers<[1], [0], [0], [1], [0, 0, 1, 1], [], []>} : vector<16x24xbf16>, vector<24x8xbf16>, vector<16x8xf32> -> vector<16x8xf32>
    %c0_45 = arith.constant 0 : index
    %c0_46 = arith.constant 0 : index
    %67 = vector.load %arg7[%c0_45, %c0_46] : memref<12x8xbf16, #tpu.memory_space<vmem>>, vector<12x8xbf16>
    %cst_47 = arith.constant dense<0.000000e+00> : vector<16x8xf32>
    %68 = tpu.matmul %64, %67, %cst_47 {dimension_numbers = #tpu.dot_dimension_numbers<[1], [0], [0], [1], [0, 0, 1, 1], [], []>} : vector<16x12xbf16>, vector<12x8xbf16>, vector<16x8xf32> -> vector<16x8xf32>
    %69 = arith.addf %66, %68 : vector<16x8xf32>
    %c0_48 = arith.constant 0 : index
    %c0_49 = arith.constant 0 : index
    %70 = vector.load %arg8[%c0_48, %c0_49] : memref<1x8xf32, #tpu.memory_space<vmem>>, vector<1x8xf32>
    %71 = vector.broadcast %70 : vector<1x8xf32> to vector<16x8xf32>
    %72 = arith.addf %69, %71 : vector<16x8xf32>
    %73 = vector.shape_cast %72 : vector<16x8xf32> to vector<2x8x8xf32>
    %c0_50 = arith.constant 0 : index
    %c0_51 = arith.constant 0 : index
    %c0_52 = arith.constant 0 : index
    %c0_53 = arith.constant 0 : index
    %74 = vector.load %arg9[%c0_50, %c0_51, %c0_52, %c0_53] : memref<1x2x8x8xf32, #tpu.memory_space<vmem>>, vector<1x2x8x8xf32>
    %75 = vector.shape_cast %74 : vector<1x2x8x8xf32> to vector<2x8x8xf32>
    %76 = vector.shape_cast %73 : vector<2x8x8xf32> to vector<1x2x8x8xf32>
    tpu.vector_store %arg9[%c0_50, %c0_51, %c0_52, %c0_53], %76 {strides = array<i32>} : memref<1x2x8x8xf32, #tpu.memory_space<vmem>>, vector<1x2x8x8xf32>,
    return
  }
  func.func @transform_0(%arg0: i32, %arg1: i32) -> (i32, i32, i32, i32) {
    %c0_i32 = arith.constant 0 : i32
    %c0_i32_0 = arith.constant 0 : i32
    %c0_i32_1 = arith.constant 0 : i32
    return %arg0, %arg1, %c0_i32, %c0_i32_0 : i32, i32, i32, i32
  }
  func.func @transform_1(%arg0: i32, %arg1: i32) -> (i32, i32, i32, i32) {
    %c2_i32 = arith.constant 2 : i32
    %0 = arith.muli %arg1, %c2_i32 : i32
    %c1_i32 = arith.constant 1 : i32
    %1 = arith.subi %0, %c1_i32 : i32
    %c0_i32 = arith.constant 0 : i32
    %2 = arith.maxsi %1, %c0_i32 : i32
    %c0_i32_0 = arith.constant 0 : i32
    %c0_i32_1 = arith.constant 0 : i32
    %c0_i32_2 = arith.constant 0 : i32
    return %arg0, %2, %c0_i32_0, %c0_i32_1 : i32, i32, i32, i32
  }
  func.func @transform_2(%arg0: i32, %arg1: i32) -> (i32, i32) {
    %c0_i32 = arith.constant 0 : i32
    %c0_i32_0 = arith.constant 0 : i32
    %c0_i32_1 = arith.constant 0 : i32
    return %c0_i32, %c0_i32_0 : i32, i32
  }
  func.func @transform_3(%arg0: i32, %arg1: i32) -> (i32, i32) {
    %c0_i32 = arith.constant 0 : i32
    %c0_i32_0 = arith.constant 0 : i32
    %c0_i32_1 = arith.constant 0 : i32
    return %c0_i32, %c0_i32_0 : i32, i32
  }
  func.func @transform_4(%arg0: i32, %arg1: i32) -> (i32, i32) {
    %c0_i32 = arith.constant 0 : i32
    %c0_i32_0 = arith.constant 0 : i32
    %c0_i32_1 = arith.constant 0 : i32
    return %c0_i32, %c0_i32_0 : i32, i32
  }
  func.func @transform_5(%arg0: i32, %arg1: i32) -> (i32, i32) {
    %c0_i32 = arith.constant 0 : i32
    %c0_i32_0 = arith.constant 0 : i32
    %c0_i32_1 = arith.constant 0 : i32
    return %c0_i32, %c0_i32_0 : i32, i32
  }
  func.func @transform_6(%arg0: i32, %arg1: i32) -> (i32, i32) {
    %c0_i32 = arith.constant 0 : i32
    %c0_i32_0 = arith.constant 0 : i32
    %c0_i32_1 = arith.constant 0 : i32
    return %c0_i32, %c0_i32_0 : i32, i32
  }
  func.func @transform_7(%arg0: i32, %arg1: i32) -> (i32, i32, i32, i32) {
    %c0_i32 = arith.constant 0 : i32
    %c0_i32_0 = arith.constant 0 : i32
    %c0_i32_1 = arith.constant 0 : i32
    return %arg0, %arg1, %c0_i32, %c0_i32_0 : i32, i32, i32, i32
  }
}

</mosaic_0001>

<llo_original>
// kernel: tpu_custom_call.1
$region0: #{tpu_custom_call.1}
  #allocation0 [shape = 'u32[]', space=smem, size = 0x4, offset = 0x4, fixed_abs, tag = 'smem constant byte address 0x4 - core index']
  #allocation1 [shape = 'u32[144,128]{1,0:T(1,128)}', space=vmem, size = 0x12000, scoped, tag = 'internal scratch']
  #allocation2 [shape = 'bf16[3,8,24]{2,1,0:T(8,128)(2,1)}', space=vmem, size = 0x1800, scoped, tag = 'scratch operand']
  %s0 = inlined_call_operand.hbm [shape: f32[2,8,8,16], index: 0, kind: input, shape index: {}]
  %s1 = inlined_call_operand.hbm [shape: f32[2,8,8,16], index: 1, kind: input, shape index: {}]
  %s2 = inlined_call_operand.vmem [shape: f32[1,16], index: 2, kind: input, shape index: {}]
  %s3 = inlined_call_operand.vmem [shape: f32[1,16], index: 3, kind: input, shape index: {}]
  %s4 = inlined_call_operand.vmem [shape: bf16[24,8], index: 4, kind: input, shape index: {}]
  %s5 = inlined_call_operand.vmem [shape: bf16[12,8], index: 5, kind: input, shape index: {}]
  %s6 = inlined_call_operand.vmem [shape: f32[1,8], index: 6, kind: input, shape index: {}]
  %s7 = inlined_call_operand.hbm [shape: f32[2,8,8,8], index: 7, kind: output, shape index: {}]
  %s8 = sld [smem:[#allocation0]]
  $region69: #{tpu_custom_call.1} parent=0
    _
  %s10 = ssub.s32 1, %s8
  %s11 = scalar_select 0, %s10, %s8
  $region1: #{tpu_custom_call.1} parent=0
    #allocation3 [shape = 'u8[16384]{0}', space=vmem, size = 0x4000, scoped, tag = 'input window, operand 0']
    #allocation4 [shape = 's32[2]{0}', space=sflag, size = 0x8, scoped, tag = 'scoped memory for tpu_custom_call.1']
    #allocation5 [shape = 's32[2]{0}', space=sflag, size = 0x8, scoped, tag = 'scoped memory for tpu_custom_call.1']
    #allocation6 [shape = 'u8[8192]{0}', space=vmem, size = 0x2000, scoped, tag = 'input window, operand 1']
    #allocation7 [shape = 's32[2]{0}', space=sflag, size = 0x8, scoped, tag = 'scoped memory for tpu_custom_call.1']
    #allocation8 [shape = 'u8[16384]{0}', space=vmem, size = 0x4000, scoped, tag = 'output window, operand 0']
    %12 = vsyncpa [#allocation4], 0
    %s13 = scalar_lea.sflag [#allocation4], 1
    %14 = vsyncpa %s13, 0
    %15 = vsyncpa [#allocation7], 0
    %s16 = scalar_lea.sflag [#allocation7], 1
    %17 = vsyncpa %s16, 0
    %18 = vsyncpa [#allocation5], 0
    %s19 = scalar_lea.sflag [#allocation5], 1
    %20 = vsyncpa %s19, 0
    loop: start=0, step=1, limit=10
    $region2: #{tpu_custom_call.1} parent=1 // loop_pre_header
      _
    $region3: #{tpu_custom_call.1} parent=1 // loop_header
      %s22 = sphi 0, %s26
      %p23 = scmp.ge.s32.totalorder %s22, 10
      %s29 = sphi 0, %s41
      %s30 = sphi 0, %s37
      %s31 = sphi 0, %s29
      %s32 = sphi 0, %s30
      %s33 = sphi 0, %s31
      %s34 = sphi 0, %s32
      %s46 = sphi 0, %s48
      %s49 = sphi 0, %s46
      %s50 = sphi 0, %s49
      %s66 = sphi 0, %s50
      %s82 = sphi 0, %s84
      %s85 = sphi 0, %s82
      %s86 = sphi 0, %s85
      %s102 = sphi 0, %s86
      %s106 = sphi 0, %s106
      %s108 = sphi 0, %s106
      %s109 = sphi 0, %s108
      %s123 = sphi 0, %s109
      %s127 = sphi 0, %s127
      %s129 = sphi 0, %s127
      %s130 = sphi 0, %s129
      %s144 = sphi 0, %s130
      %s148 = sphi 0, %s148
      %s150 = sphi 0, %s148
      %s151 = sphi 0, %s150
      %s165 = sphi 0, %s151
      %s169 = sphi 0, %s169
      %s171 = sphi 0, %s169
      %s172 = sphi 0, %s171
      %s186 = sphi 0, %s172
      %s190 = sphi 0, %s190
      %s192 = sphi 0, %s190
      %s193 = sphi 0, %s192
      %s207 = sphi 0, %s193
      %s215 = sphi 0, %s217
      %s218 = sphi 0, %s215
      %s219 = sphi 0, %s218
      %s235 = sphi 0, %s219
    $region4: #{tpu_custom_call.1} parent=1 // loop_header_branch
      %25 = sbr.rel (%p23) target = $region8
    $region5: #{tpu_custom_call.1} parent=1 // loop_body
      %s27 = ssub.s32 %s22, 1
      %s28 = ssub.s32 %s22, 2
      %s35 = sadd.s32 1, %s30
      %p36 = scmp.ge.s32.totalorder %s35, 4
      %s37 = scalar_select %p36, 0, %s35
      %s38 = sadd.s32 1, %s29
      %s39 = scalar_select %p36, %s38, %s29
      %p40 = scmp.ge.s32.totalorder %s39, 2
      %s41 = scalar_select %p40, 0, %s39
      %s42 = ssub.s32 %s29, %s41
      %s43 = ssub.s32 %s30, %s37
      %s44 = sor.u32 %s42, %s43
      %p45 = scmp.eq.s32.totalorder %s44, 0
      %s47 = sadd.s32 %s46, 1
      %s48 = scalar_select %p45, %s46, %s47
      %p51 = pneg %p45
      %p52 = scmp.eq.s32.totalorder %s22, 7
      %p53 = por %p51, %p52
      %p54 = scmp.ne.s32.totalorder %s46, %s49
      %p55 = scmp.eq.s32.totalorder %s22, 0
      %p56 = por %p54, %p55
      %p57 = scmp.ne.s32.totalorder %s46, %s49
      %p58 = scmp.eq.s32.totalorder %s27, 7
      %p59 = por %p57, %p58
      %p60 = scmp.ne.s32.totalorder %s49, %s50
      %p61 = scmp.eq.s32.totalorder %s27, 0
      %p62 = por %p60, %p61
      %p63 = scmp.ne.s32.totalorder %s49, %s50
      %p64 = scmp.eq.s32.totalorder %s28, 7
      %p65 = por %p63, %p64
      %p67 = scmp.ne.s32.totalorder %s50, %s66
      %p68 = scmp.eq.s32.totalorder %s28, 0
      %p69 = por %p67, %p68
      %s70 = smul.u32 %s30, 2
      %s71 = ssub.s32 %s70, 1
      %p72 = scmp.gt.s32.totalorder %s71, 0
      %s73 = scalar_select %p72, %s71, 0
      %s74 = smul.u32 %s37, 2
      %s75 = ssub.s32 %s74, 1
      %p76 = scmp.gt.s32.totalorder %s75, 0
      %s77 = scalar_select %p76, %s75, 0
      %s78 = ssub.s32 %s29, %s41
      %s79 = ssub.s32 %s73, %s77
      %s80 = sor.u32 %s78, %s79
      %p81 = scmp.eq.s32.totalorder %s80, 0
      %s83 = sadd.s32 %s82, 1
      %s84 = scalar_select %p81, %s82, %s83
      %p87 = pneg %p81
      %p88 = scmp.eq.s32.totalorder %s22, 7
      %p89 = por %p87, %p88
      %p90 = scmp.ne.s32.totalorder %s82, %s85
      %p91 = scmp.eq.s32.totalorder %s22, 0
      %p92 = por %p90, %p91
      %p93 = scmp.ne.s32.totalorder %s82, %s85
      %p94 = scmp.eq.s32.totalorder %s27, 7
      %p95 = por %p93, %p94
      %p96 = scmp.ne.s32.totalorder %s85, %s86
      %p97 = scmp.eq.s32.totalorder %s27, 0
      %p98 = por %p96, %p97
      %p99 = scmp.ne.s32.totalorder %s85, %s86
      %p100 = scmp.eq.s32.totalorder %s28, 7
      %p101 = por %p99, %p100
      %p103 = scmp.ne.s32.totalorder %s86, %s102
      %p104 = scmp.eq.s32.totalorder %s28, 0
      %p105 = por %p103, %p104
      %s107 = sadd.s32 %s106, 1
      %p110 = scmp.eq.s32.totalorder %s22, 7
      %p111 = scmp.ne.s32.totalorder %s106, %s108
      %p112 = scmp.eq.s32.totalorder %s22, 0
      %p113 = por %p111, %p112
      %p114 = scmp.ne.s32.totalorder %s106, %s108
      %p115 = scmp.eq.s32.totalorder %s27, 7
      %p116 = por %p114, %p115
      %p117 = scmp.ne.s32.totalorder %s108, %s109
      %p118 = scmp.eq.s32.totalorder %s27, 0
      %p119 = por %p117, %p118
      %p120 = scmp.ne.s32.totalorder %s108, %s109
      %p121 = scmp.eq.s32.totalorder %s28, 7
      %p122 = por %p120, %p121
      %p124 = scmp.ne.s32.totalorder %s109, %s123
      %p125 = scmp.eq.s32.totalorder %s28, 0
      %p126 = por %p124, %p125
      %s128 = sadd.s32 %s127, 1
      %p131 = scmp.eq.s32.totalorder %s22, 7
      %p132 = scmp.ne.s32.totalorder %s127, %s129
      %p133 = scmp.eq.s32.totalorder %s22, 0
      %p134 = por %p132, %p133
      %p135 = scmp.ne.s32.totalorder %s127, %s129
      %p136 = scmp.eq.s32.totalorder %s27, 7
      %p137 = por %p135, %p136
      %p138 = scmp.ne.s32.totalorder %s129, %s130
      %p139 = scmp.eq.s32.totalorder %s27, 0
      %p140 = por %p138, %p139
      %p141 = scmp.ne.s32.totalorder %s129, %s130
      %p142 = scmp.eq.s32.totalorder %s28, 7
      %p143 = por %p141, %p142
      %p145 = scmp.ne.s32.totalorder %s130, %s144
      %p146 = scmp.eq.s32.totalorder %s28, 0
      %p147 = por %p145, %p146
      %s149 = sadd.s32 %s148, 1
      %p152 = scmp.eq.s32.totalorder %s22, 7
      %p153 = scmp.ne.s32.totalorder %s148, %s150
      %p154 = scmp.eq.s32.totalorder %s22, 0
      %p155 = por %p153, %p154
      %p156 = scmp.ne.s32.totalorder %s148, %s150
      %p157 = scmp.eq.s32.totalorder %s27, 7
      %p158 = por %p156, %p157
      %p159 = scmp.ne.s32.totalorder %s150, %s151
      %p160 = scmp.eq.s32.totalorder %s27, 0
      %p161 = por %p159, %p160
      %p162 = scmp.ne.s32.totalorder %s150, %s151
      %p163 = scmp.eq.s32.totalorder %s28, 7
      %p164 = por %p162, %p163
      %p166 = scmp.ne.s32.totalorder %s151, %s165
      %p167 = scmp.eq.s32.totalorder %s28, 0
      %p168 = por %p166, %p167
      %s170 = sadd.s32 %s169, 1
      %p173 = scmp.eq.s32.totalorder %s22, 7
      %p174 = scmp.ne.s32.totalorder %s169, %s171
      %p175 = scmp.eq.s32.totalorder %s22, 0
      %p176 = por %p174, %p175
      %p177 = scmp.ne.s32.totalorder %s169, %s171
      %p178 = scmp.eq.s32.totalorder %s27, 7
      %p179 = por %p177, %p178
      %p180 = scmp.ne.s32.totalorder %s171, %s172
      %p181 = scmp.eq.s32.totalorder %s27, 0
      %p182 = por %p180, %p181
      %p183 = scmp.ne.s32.totalorder %s171, %s172
      %p184 = scmp.eq.s32.totalorder %s28, 7
      %p185 = por %p183, %p184
      %p187 = scmp.ne.s32.totalorder %s172, %s186
      %p188 = scmp.eq.s32.totalorder %s28, 0
      %p189 = por %p187, %p188
      %s191 = sadd.s32 %s190, 1
      %p194 = scmp.eq.s32.totalorder %s22, 7
      %p195 = scmp.ne.s32.totalorder %s190, %s192
      %p196 = scmp.eq.s32.totalorder %s22, 0
      %p197 = por %p195, %p196
      %p198 = scmp.ne.s32.totalorder %s190, %s192
      %p199 = scmp.eq.s32.totalorder %s27, 7
      %p200 = por %p198, %p199
      %p201 = scmp.ne.s32.totalorder %s192, %s193
      %p202 = scmp.eq.s32.totalorder %s27, 0
      %p203 = por %p201, %p202
      %p204 = scmp.ne.s32.totalorder %s192, %s193
      %p205 = scmp.eq.s32.totalorder %s28, 7
      %p206 = por %p204, %p205
      %p208 = scmp.ne.s32.totalorder %s193, %s207
      %p209 = scmp.eq.s32.totalorder %s28, 0
      %p210 = por %p208, %p209
      %s211 = ssub.s32 %s29, %s41
      %s212 = ssub.s32 %s30, %s37
      %s213 = sor.u32 %s211, %s212
      %p214 = scmp.eq.s32.totalorder %s213, 0
      %s216 = sadd.s32 %s215, 1
      %s217 = scalar_select %p214, %s215, %s216
      %p220 = pneg %p214
      %p221 = scmp.eq.s32.totalorder %s22, 7
      %p222 = por %p220, %p221
      %p223 = scmp.ne.s32.totalorder %s215, %s218
      %p224 = scmp.eq.s32.totalorder %s22, 0
      %p225 = por %p223, %p224
      %p226 = scmp.ne.s32.totalorder %s215, %s218
      %p227 = scmp.eq.s32.totalorder %s27, 7
      %p228 = por %p226, %p227
      %p229 = scmp.ne.s32.totalorder %s218, %s219
      %p230 = scmp.eq.s32.totalorder %s27, 0
      %p231 = por %p229, %p230
      %p232 = scmp.ne.s32.totalorder %s218, %s219
      %p233 = scmp.eq.s32.totalorder %s28, 7
      %p234 = por %p232, %p233
      %p236 = scmp.ne.s32.totalorder %s219, %s235
      %p237 = scmp.eq.s32.totalorder %s28, 0
      %p238 = por %p236, %p237
      %p239 = scmp.le.s32.totalorder 1, %s22
      %p240 = scmp.lt.s32.totalorder %s22, 9
      %p241 = pnand %p239, %p240
      %p242 = pneg %p241
      // Predicated region
      $region9: #{tpu_custom_call.1} parent=5 // pred_check
        _
      $region10: #{tpu_custom_call.1} parent=5 // pred_check_branch
        %244 = sbr.rel (%p241) target = $region12
      $region11: #{tpu_custom_call.1} parent=5 // pred_region
        %s245 = ssub.s32 %s22, 1
        // Predicated region
        $region13: #{tpu_custom_call.1} parent=11 // pred_check
          %p246 = pneg %p119
        $region14: #{tpu_custom_call.1} parent=11 // pred_check_branch
          %248 = sbr.rel (%p246) target = $region16
        $region15: #{tpu_custom_call.1} parent=11 // pred_region
          _
        $region16: #{tpu_custom_call.1} parent=11 // pred_fallthru
          _
        // Predicated region
        $region17: #{tpu_custom_call.1} parent=11 // pred_check
          %p249 = pneg %p140
        $region18: #{tpu_custom_call.1} parent=11 // pred_check_branch
          %251 = sbr.rel (%p249) target = $region20
        $region19: #{tpu_custom_call.1} parent=11 // pred_region
          _
        $region20: #{tpu_custom_call.1} parent=11 // pred_fallthru
          _
        // Predicated region
        $region21: #{tpu_custom_call.1} parent=11 // pred_check
          %p252 = pneg %p161
        $region22: #{tpu_custom_call.1} parent=11 // pred_check_branch
          %254 = sbr.rel (%p252) target = $region24
        $region23: #{tpu_custom_call.1} parent=11 // pred_region
          _
        $region24: #{tpu_custom_call.1} parent=11 // pred_fallthru
          _
        // Predicated region
        $region25: #{tpu_custom_call.1} parent=11 // pred_check
          %p255 = pneg %p182
        $region26: #{tpu_custom_call.1} parent=11 // pred_check_branch
          %257 = sbr.rel (%p255) target = $region28
        $region27: #{tpu_custom_call.1} parent=11 // pred_region
          _
        $region28: #{tpu_custom_call.1} parent=11 // pred_fallthru
          _
        // Predicated region
        $region29: #{tpu_custom_call.1} parent=11 // pred_check
          %p258 = pneg %p203
        $region30: #{tpu_custom_call.1} parent=11 // pred_check_branch
          %260 = sbr.rel (%p258) target = $region32
        $region31: #{tpu_custom_call.1} parent=11 // pred_region
          _
        $region32: #{tpu_custom_call.1} parent=11 // pred_fallthru
          _
      $region12: #{tpu_custom_call.1} parent=5 // pred_fallthru
        _
      %p261 = scmp.lt.s32.totalorder %s22, 8
      // Predicated region
      $region33: #{tpu_custom_call.1} parent=5 // pred_check
        %p262 = pneg %p261
      $region34: #{tpu_custom_call.1} parent=5 // pred_check_branch
        %264 = sbr.rel (%p262) target = $region36
      $region35: #{tpu_custom_call.1} parent=5 // pred_region
        // Predicated region
        $region37: #{tpu_custom_call.1} parent=35 // pred_check
          %p265 = pneg %p56
        $region38: #{tpu_custom_call.1} parent=35 // pred_check_branch
          %267 = sbr.rel (%p265) target = $region40
        $region39: #{tpu_custom_call.1} parent=35 // pred_region
          %s268 = sand.u32 %s46, 1
          %s269 = scalar_lea.sflag [#allocation4], %s268
          %s270 = sand.u32 %s46, 1
          %s271 = smul.addr %s270, 16
          %s272 = scalar_lea.vmem [#allocation3], %s271
          %s273 = smul.u32 2, %s30
          %s275 = ssub.s32 256, 256
          %276 = vsyncadd %s269, %s275
          %s277 = smul.addr %s29, 8
          %s278 = sadd.s32 %s273, %s277
          %s279 = smul.addr %s278, 128
          %s280 = scalar_lea.hbm %s0, %s279
          %s281 = sshll.u32 %s272, 4
          %s282 = int_to_ptr.vmem [resolvable:$true] %s281
          %287 = dma.hbm_to_vmem [thread:$0]  %s280, 256, %s282, %s269, 128, 128, 8
        $region40: #{tpu_custom_call.1} parent=35 // pred_fallthru
          _
        // Predicated region
        $region41: #{tpu_custom_call.1} parent=35 // pred_check
          %p288 = pneg %p92
        $region42: #{tpu_custom_call.1} parent=35 // pred_check_branch
          %290 = sbr.rel (%p288) target = $region44
        $region43: #{tpu_custom_call.1} parent=35 // pred_region
          %s291 = sand.u32 %s82, 1
          %s292 = scalar_lea.sflag [#allocation7], %s291
          %s293 = sand.u32 %s82, 1
          %s294 = smul.addr %s293, 8
          %s295 = scalar_lea.vmem [#allocation6], %s294
          %s296 = smul.u32 %s30, 2
          %s297 = ssub.s32 %s296, 1
          %p298 = scmp.gt.s32.totalorder %s297, 0
          %s299 = scalar_select %p298, %s297, 0
          %s301 = ssub.s32 128, 128
          %302 = vsyncadd %s292, %s301
          %s303 = smul.addr %s29, 8
          %s304 = sadd.s32 %s299, %s303
          %s305 = smul.addr %s304, 128
          %s306 = scalar_lea.hbm %s1, %s305
          %s308 = sshll.u32 %s295, 4
          %s309 = int_to_ptr.vmem [resolvable:$true] %s308
          %311 = dma.hbm_to_vmem [thread:$0]  %s306, 128, %s309, %s292
        $region44: #{tpu_custom_call.1} parent=35 // pred_fallthru
          _
      $region36: #{tpu_custom_call.1} parent=5 // pred_fallthru
        _
      %p312 = scmp.le.s32.totalorder 1, %s22
      %p313 = scmp.lt.s32.totalorder %s22, 9
      %p314 = pnand %p312, %p313
      %p315 = pneg %p314
      // Predicated region
      $region45: #{tpu_custom_call.1} parent=5 // pred_check
        _
      $region46: #{tpu_custom_call.1} parent=5 // pred_check_branch
        %317 = sbr.rel (%p314) target = $region48
      $region47: #{tpu_custom_call.1} parent=5 // pred_region
        %s318 = ssub.s32 %s22, 1
        %s319 = sand.u32 %s49, 1
        %s320 = scalar_lea.sflag [#allocation4], %s319
        %s321 = sand.u32 %s49, 1
        %s322 = smul.addr %s321, 16
        %s323 = scalar_lea.vmem [#allocation3], %s322
        // Predicated region
        $region49: #{tpu_custom_call.1} parent=47 // pred_check
          %p324 = pneg %p62
        $region50: #{tpu_custom_call.1} parent=47 // pred_check_branch
          %326 = sbr.rel (%p324) target = $region52
        $region51: #{tpu_custom_call.1} parent=47 // pred_region
          %327 = dma.done %s320, 256
        $region52: #{tpu_custom_call.1} parent=47 // pred_fallthru
          _
        %s328 = sand.u32 %s85, 1
        %s329 = scalar_lea.sflag [#allocation7], %s328
        %s330 = sand.u32 %s85, 1
        %s331 = smul.addr %s330, 8
        %s332 = scalar_lea.vmem [#allocation6], %s331
        // Predicated region
        $region53: #{tpu_custom_call.1} parent=47 // pred_check
          %p333 = pneg %p98
        $region54: #{tpu_custom_call.1} parent=47 // pred_check_branch
          %335 = sbr.rel (%p333) target = $region56
        $region55: #{tpu_custom_call.1} parent=47 // pred_region
          %336 = dma.done %s329, 128
        $region56: #{tpu_custom_call.1} parent=47 // pred_fallthru
          _
        %s337 = sand.u32 %s49, 1
        %s338 = scalar_lea.sflag [#allocation4], %s337
        %s339 = sand.u32 %s49, 1
        %s340 = smul.addr %s339, 16
        %s341 = scalar_lea.vmem [#allocation3], %s340
        %p342 = pneg %p62
        %p343 = pneg %p59
        %s344 = sand.u32 %s85, 1
        %s345 = scalar_lea.sflag [#allocation7], %s344
        %s346 = sand.u32 %s85, 1
        %s347 = smul.addr %s346, 8
        %s348 = scalar_lea.vmem [#allocation6], %s347
        %p349 = pneg %p98
        %p350 = pneg %p95
        %p351 = pneg %p119
        %p352 = pneg %p116
        %p353 = pneg %p140
        %p354 = pneg %p137
        %p355 = pneg %p161
        %p356 = pneg %p158
        %p357 = pneg %p182
        %p358 = pneg %p179
        %p359 = pneg %p203
        %p360 = pneg %p200
        %p361 = pneg %p231
        %p362 = pneg %p228
        %s363 = sand.u32 %s218, 1
        %s364 = scalar_lea.sflag [#allocation5], %s363
        %s365 = sand.u32 %s218, 1
        %s366 = smul.addr %s365, 16
        %s367 = scalar_lea.vmem [#allocation8], %s366
        %s368 = smul.u32 2, %s32
        %s369 = smul.u32 %s32, 2
        %s370 = ssub.s32 %s369, 1
        %p371 = scmp.gt.s32.totalorder %s370, 0
        %s372 = scalar_select %p371, %s370, 0
        %s373 = smul.u32 2, %s32
        %v375 = vld [vmem:[%s2] sm:$0x1]
        %v376 = vld [vmem:[%s3] sm:$0x1]
        %v377 = vld [vmem:[%s323] sm:$0xff]
        %v378 = vld [vmem:[%s323 + $0x8] sm:$0xff]
        %v380 = vlaneseq
        %v381 = vshrl.u32 %v380, 7
        %v382 = vsub.s32 0, %v381
        %v383 = vrot.slane %v375, %v382
        %v385 = vmul.f32 %v377, %v383
        %v386 = vmul.f32 %v378, %v383
        %v388 = vlaneseq
        %v389 = vshrl.u32 %v388, 7
        %v390 = vsub.s32 0, %v389
        %v391 = vrot.slane %v376, %v390
        %v393 = vadd.f32 %v385, %v391
        %v394 = vadd.f32 %v386, %v391
        %v395 = vmax.f32 %v393, 0.0
        %v396 = vmax.f32 %v394, 0.0
        %v397 = vpack.c.bf16 %v395, %v395
        %v398 = vpack.c.bf16 %v396, %v396
        %s399 = scalar_lea.vmem [#allocation2], 4
        %vm400 = vcmask 60416
        %401 = vst.msk [vmem:[%s399] sm:$0xf] %vm400, %v397
        %402 = vst.msk [vmem:[%s399 + $0x4] sm:$0xf] %vm400, %v398
        %v405 = vunpack.c.l.b16 %v397
        %v406 = vunpack.c.l.b16 %v398
        %v407 = vpack.c.b16 %v405, %v405
        %v408 = vpack.c.b16 %v406, %v406
        %409 = vrot.lane.b32.xlu0 %v407, 4
        %v410 = vpop.permute.xlu0 %409
        %411 = vrot.lane.b32.xlu0 %v408, 4
        %v412 = vpop.permute.xlu0 %411
        %vm415 = vcmask 158816
        %416 = vst.msk [vmem:[%s399] sm:$0xf] %vm415, %v410
        %417 = vst.msk [vmem:[%s399 + $0x4] sm:$0xf] %vm415, %v412
        %v420 = vrot.slane %v395, 7
        %v421 = vrot.slane %v396, 7
        %422 = vrot.lane.b32.xlu0 %v420, 124
        %v423 = vpop.permute.xlu0 %422
        %424 = vrot.lane.b32.xlu0 %v421, 124
        %v425 = vpop.permute.xlu0 %424
        %vm428 = vcmask 1040384
        %v429 = vsel %vm428, 0.0, %v423
        %v430 = vsel %vm428, 0.0, %v425
        %v431 = vpack.c.bf16 %v429, %v429
        %v432 = vpack.c.bf16 %v430, %v430
        %v435 = vunpack.c.l.b16 %v431
        %v436 = vunpack.c.l.b16 %v432
        %v437 = vpack.c.b16 %v435, %v435
        %v438 = vpack.c.b16 %v436, %v436
        %439 = vrot.lane.b32.xlu0 %v437, 8
        %v440 = vpop.permute.xlu0 %439
        %441 = vrot.lane.b32.xlu0 %v438, 8
        %v442 = vpop.permute.xlu0 %441
        %vm445 = vcmask 93248
        %446 = vst.msk [vmem:[%s399] sm:$0xf] %vm445, %v440
        %447 = vst.msk [vmem:[%s399 + $0x4] sm:$0xf] %vm445, %v442
        %448 = vrot.lane.b32.xlu0 %v420, 116
        %v449 = vpop.permute.xlu0 %448
        %450 = vrot.lane.b32.xlu0 %v421, 116
        %v451 = vpop.permute.xlu0 %450
        %v454 = vsel %vm428, 0.0, %v449
        %v455 = vsel %vm428, 0.0, %v451
        %v456 = vpack.c.bf16 %v454, %v454
        %v457 = vpack.c.bf16 %v455, %v455
        %v460 = vunpack.c.l.b16 %v456
        %v461 = vunpack.c.l.b16 %v457
        %v462 = vpack.c.b16 %v460, %v460
        %v463 = vpack.c.b16 %v461, %v461
        %464 = vrot.lane.b32.xlu0 %v462, 20
        %v465 = vpop.permute.xlu0 %464
        %466 = vrot.lane.b32.xlu0 %v463, 20
        %v467 = vpop.permute.xlu0 %466
        %vm470 = vcmask 191648
        %471 = vst.msk [vmem:[%s399] sm:$0xf] %vm470, %v465
        %472 = vst.msk [vmem:[%s399 + $0x4] sm:$0xf] %vm470, %v467
        %v473 = vld [vmem:[%s332] sm:$0xff]
        %v474 = vmul.f32 %v473, %v383
        %v475 = vadd.f32 %v474, %v391
        %v476 = vmax.f32 %v475, 0.0
        %p477 = scmp.gt.s32.totalorder %s32, 0
        %s478 = scalar_select %p477, 1, 0
        %s479 = scvt.s32.f32 %s478
        %v480 = vstv %s479
        %v481 = vmul.f32 %v476, %v480
        %v482 = vpack.c.bf16 %v481, %v481
        %483 = vst.msk [vmem:[#allocation2] sm:$0xf] %vm400, %v482
        %v485 = vunpack.c.l.b16 %v482
        %v486 = vpack.c.b16 %v485, %v485
        %487 = vrot.lane.b32.xlu0 %v486, 4
        %v488 = vpop.permute.xlu0 %487
        %490 = vst.msk [vmem:[#allocation2] sm:$0xf] %vm415, %v488
        %v492 = vrot.slane %v481, 7
        %493 = vrot.lane.b32.xlu0 %v492, 124
        %v494 = vpop.permute.xlu0 %493
        %v496 = vsel %vm428, 0.0, %v494
        %v497 = vpack.c.bf16 %v496, %v496
        %v499 = vunpack.c.l.b16 %v497
        %v500 = vpack.c.b16 %v499, %v499
        %501 = vrot.lane.b32.xlu0 %v500, 8
        %v502 = vpop.permute.xlu0 %501
        %504 = vst.msk [vmem:[#allocation2] sm:$0xf] %vm445, %v502
        %505 = vrot.lane.b32.xlu0 %v492, 116
        %v506 = vpop.permute.xlu0 %505
        %v508 = vsel %vm428, 0.0, %v506
        %v509 = vpack.c.bf16 %v508, %v508
        %v511 = vunpack.c.l.b16 %v509
        %v512 = vpack.c.b16 %v511, %v511
        %513 = vrot.lane.b32.xlu0 %v512, 20
        %v514 = vpop.permute.xlu0 %513
        %516 = vst.msk [vmem:[#allocation2] sm:$0xf] %vm470, %v514
        %v517 = vld [vmem:[%s399] sm:$0xf]
        %v518 = vld [vmem:[%s399 + $0x4] sm:$0xf]
        %v519 = vld [vmem:[#allocation2] sm:$0xf]
        %v520 = vld [vmem:[#allocation2 + $0x4] sm:$0xf]
        %v521 = vld [vmem:[%s4] sm:$0xf]
        %v522 = vld [vmem:[%s4 + $0x4] sm:$0xf]
        %v523 = vld [vmem:[%s4 + $0x8] sm:$0xf]
        %v524 = vld [vmem:[%s5] sm:$0xf]
        %v525 = vld [vmem:[%s5 + $0x4] sm:$0x3]
        %v528 = vunpack.c.l.b16 %v519
        %v529 = vunpack.c.l.b16 %v520
        %v530 = vpack.c.b16 %v529, %v528
        %531 = vrot.lane.b32.xlu0 %v530, 116
        %v532 = vpop.permute.xlu0 %531
        %v535 = vunpack.c.l.b16 %v524
        %v536 = vunpack.c.l.b16 %v525
        %v537 = vpack.c.b16 %v536, %v535
        %vm538 = vcmask 97280
        %v540 = vsel %vm538, %v532, 0
        %vm542 = vcmask 1045504
        %v544 = vsel %vm542, %v537, 0
        %546 = vmatprep.subr.bf16.mxu0 0
        %547 = vmatpush1.bf16.msra.mxu0 0
        %548 = vmatprep.subr.bf16.mxu0 0
        %549 = vmatpush1.bf16.msra.mxu0 0
        %550 = vmatprep.subr.bf16.mxu0 0
        %551 = vmatpush1.bf16.msra.mxu0 0
        %552 = vmatprep.subr.bf16.mxu0 0
        %553 = vmatpush1.bf16.msra.mxu0 0
        %554 = vmatprep.subr.bf16.mxu0 0
        %555 = vmatpush1.bf16.msra.mxu0 0
        %556 = vmatprep.subr.bf16.mxu0 0
        %557 = vmatpush1.bf16.msra.mxu0 0
        %558 = vmatprep.subr.bf16.mxu0 0
        %559 = vmatpush1.bf16.msra.mxu0 0
        %560 = vmatprep.subr.bf16.mxu0 0
        %561 = vmatpush1.bf16.msra.mxu0 %v544
        %562 = vmatprep.subr.bf16.mxu0 0
        %563 = vmatpush2.bf16.msra.mxu0 0
        %564 = vmatprep.subr.bf16.mxu0 0
        %565 = vmatpush2.bf16.msra.mxu0 0
        %566 = vmatprep.subr.bf16.mxu0 0
        %567 = vmatpush2.bf16.msra.mxu0 0
        %568 = vmatprep.subr.bf16.mxu0 0
        %569 = vmatpush2.bf16.msra.mxu0 0
        %570 = vmatprep.subr.bf16.mxu0 0
        %571 = vmatpush2.bf16.msra.mxu0 0
        %572 = vmatprep.subr.bf16.mxu0 0
        %573 = vmatpush2.bf16.msra.mxu0 0
        %574 = vmatprep.subr.bf16.mxu0 0
        %575 = vmatpush2.bf16.msra.mxu0 0
        %576 = vmatprep.subr.bf16.mxu0 0
        %577 = vmatpush2.bf16.msra.mxu0 0
        %578 = vmatprep.mubr.bf16.mxu0 0
        %579 = vmatmul.mubr.bf16.gmra.mxu0 %v540
        %v580 = vpop.f32.mrf.mxu0
        %v581 = vadd.f32 0.0, %v580
        %v582 = vpop.f32.mrf.mxu0
        %v583 = vpop.f32.mrf.mxu0
        %v584 = vadd.f32 0.0, %v583
        %v585 = vpop.f32.mrf.mxu0
        %586 = vdwg.mxu0
        %v589 = vunpack.c.l.b16 %v517
        %v590 = vunpack.c.l.b16 %v518
        %v591 = vpack.c.b16 %v590, %v589
        %v595 = vunpack.c.l.b16 %v521
        %v596 = vunpack.c.l.b16 %v522
        %v597 = vunpack.c.l.b16 %v523
        %v598 = vpack.c.b16 %v596, %v595
        %v599 = vpack.c.b16 %v597, %v597
        %vm601 = vcmask 195584
        %v603 = vsel %vm601, %v591, 0
        %vm605 = vcmask 1043456
        %v607 = vsel %vm605, %v599, 0
        %609 = vmatprep.subr.bf16.mxu0 0
        %610 = vmatpush1.bf16.msra.mxu0 0
        %611 = vmatprep.subr.bf16.mxu0 0
        %612 = vmatpush1.bf16.msra.mxu0 0
        %613 = vmatprep.subr.bf16.mxu0 0
        %614 = vmatpush1.bf16.msra.mxu0 0
        %615 = vmatprep.subr.bf16.mxu0 0
        %616 = vmatpush1.bf16.msra.mxu0 0
        %617 = vmatprep.subr.bf16.mxu0 0
        %618 = vmatpush1.bf16.msra.mxu0 0
        %619 = vmatprep.subr.bf16.mxu0 0
        %620 = vmatpush1.bf16.msra.mxu0 0
        %621 = vmatprep.subr.bf16.mxu0 0
        %622 = vmatpush1.bf16.msra.mxu0 %v607
        %623 = vmatprep.subr.bf16.mxu0 0
        %624 = vmatpush1.bf16.msra.mxu0 %v598
        %625 = vmatprep.subr.bf16.mxu0 0
        %626 = vmatpush2.bf16.msra.mxu0 0
        %627 = vmatprep.subr.bf16.mxu0 0
        %628 = vmatpush2.bf16.msra.mxu0 0
        %629 = vmatprep.subr.bf16.mxu0 0
        %630 = vmatpush2.bf16.msra.mxu0 0
        %631 = vmatprep.subr.bf16.mxu0 0
        %632 = vmatpush2.bf16.msra.mxu0 0
        %633 = vmatprep.subr.bf16.mxu0 0
        %634 = vmatpush2.bf16.msra.mxu0 0
        %635 = vmatprep.subr.bf16.mxu0 0
        %636 = vmatpush2.bf16.msra.mxu0 0
        %637 = vmatprep.subr.bf16.mxu0 0
        %638 = vmatpush2.bf16.msra.mxu0 0
        %639 = vmatprep.subr.bf16.mxu0 0
        %640 = vmatpush2.bf16.msra.mxu0 0
        %641 = vmatprep.mubr.bf16.mxu0 0
        %642 = vmatmul.mubr.bf16.gmra.mxu0 %v603
        %v643 = vpop.f32.mrf.mxu0
        %v644 = vadd.f32 %v581, %v643
        %v645 = vpop.f32.mrf.mxu0
        %v646 = vpop.f32.mrf.mxu0
        %v647 = vadd.f32 %v584, %v646
        %v648 = vpop.f32.mrf.mxu0
        %649 = vdwg.mxu0
        %v650 = vld [vmem:[%s6] sm:$0x1]
        %v652 = vlaneseq
        %v653 = vshrl.u32 %v652, 7
        %v654 = vsub.s32 0, %v653
        %v655 = vrot.slane %v650, %v654
        %v657 = vadd.f32 %v644, %v655
        %v658 = vadd.f32 %v647, %v655
        %vm659 = vcmask 64512
        %660 = vst.msk [vmem:[%s367] sm:$0xff] %vm659, %v657
        %661 = vst.msk [vmem:[%s367 + $0x8] sm:$0xff] %vm659, %v658
        %s662 = sand.u32 %s218, 1
        %s663 = scalar_lea.sflag [#allocation5], %s662
        %s664 = sand.u32 %s218, 1
        %s665 = smul.addr %s664, 16
        %s666 = scalar_lea.vmem [#allocation8], %s665
        // Predicated region
        $region57: #{tpu_custom_call.1} parent=47 // pred_check
          %p667 = pneg %p228
        $region58: #{tpu_custom_call.1} parent=47 // pred_check_branch
          %669 = sbr.rel (%p667) target = $region60
        $region59: #{tpu_custom_call.1} parent=47 // pred_region
          %s670 = smul.u32 2, %s32
          %s672 = ssub.s32 256, 256
          %673 = vsyncadd %s663, %s672
          %s674 = smul.addr %s31, 8
          %s675 = sadd.s32 %s670, %s674
          %s676 = smul.addr %s675, 128
          %s677 = scalar_lea.hbm %s7, %s676
          %s678 = sshll.u32 %s666, 4
          %s679 = int_to_ptr.vmem [resolvable:$true] %s678
          %684 = dma.vmem_to_hbm [thread:$0]  %s679, 256, %s677, %s663, 128, 128, 8
        $region60: #{tpu_custom_call.1} parent=47 // pred_fallthru
          _
      $region48: #{tpu_custom_call.1} parent=5 // pred_fallthru
        _
      %p685 = scmp.le.s32.totalorder 2, %s22
      // Predicated region
      $region61: #{tpu_custom_call.1} parent=5 // pred_check
        %p686 = pneg %p685
      $region62: #{tpu_custom_call.1} parent=5 // pred_check_branch
        %688 = sbr.rel (%p686) target = $region64
      $region63: #{tpu_custom_call.1} parent=5 // pred_region
        %s689 = ssub.s32 %s22, 2
        // Predicated region
        $region65: #{tpu_custom_call.1} parent=63 // pred_check
          %p690 = pneg %p234
        $region66: #{tpu_custom_call.1} parent=63 // pred_check_branch
          %692 = sbr.rel (%p690) target = $region68
        $region67: #{tpu_custom_call.1} parent=63 // pred_region
          %s693 = sand.u32 %s219, 1
          %s694 = scalar_lea.sflag [#allocation5], %s693
          %s695 = sand.u32 %s219, 1
          %s696 = smul.addr %s695, 16
          %s697 = scalar_lea.vmem [#allocation8], %s696
          %698 = dma.done %s694, 256
        $region68: #{tpu_custom_call.1} parent=63 // pred_fallthru
          _
      $region64: #{tpu_custom_call.1} parent=5 // pred_fallthru
        _
    $region6: #{tpu_custom_call.1} parent=1 // loop_footer
      %s26 = sadd.s32 1, %s22
    $region7: #{tpu_custom_call.1} parent=1 // loop_footer_branch
      %21 = sbr.rel target = $region3
    $region8: #{tpu_custom_call.1} parent=1 // loop_exit
      _
    %699 = vsyncpa [#allocation4], 1
    %s700 = scalar_lea.sflag [#allocation4], 1
    %701 = vsyncpa %s700, 1
    %702 = vsyncpa [#allocation7], 1
    %s703 = scalar_lea.sflag [#allocation7], 1
    %704 = vsyncpa %s703, 1
    %705 = vsyncpa [#allocation5], 1
    %s706 = scalar_lea.sflag [#allocation5], 1
    %707 = vsyncpa %s706, 1

</llo_original>
